<compile_context>
chip_gen: v5e
topology: v5e:2x2
jax: 0.10.0
libtpu: 0.0.40
codegen_flags: <defaults>
</compile_context>

<pallas_src>
import functools

import jax
import jax.numpy as jnp
from jax import lax
from jax.experimental import pallas as pl
from jax.experimental.pallas import tpu as pltpu


def _round_up(x, m):
    return ((x + m - 1) // m) * m


def _static_int_pow(x, n):
    """x**n for a static positive integer n via repeated squaring (VPU only)."""
    acc = None
    base = x
    while n > 0:
        if n & 1:
            acc = base if acc is None else acc * base
        n >>= 1
        if n:
            base = base * base
    return acc


def _tpu_profile():
    """(vmem_capacity_bytes, tensorcores_per_chip) with safe fallbacks."""
    cap = 128 * 1024 * 1024            # v5e / v6e physical VMEM
    cores = 1
    try:
        info = pltpu.get_tpu_info()
        c = getattr(info, "vmem_capacity_bytes", None)
        if c:
            cap = int(c)
    except Exception:
        pass
    try:
        kind = jax.devices()[0].device_kind.lower()
        if "v7" in kind:
            cores = 2
    except Exception:
        pass
    if cap <= 80 * 1024 * 1024:        # 64 MiB VMEM ⇒ v7x-like (2 TCs/chip)
        cores = max(cores, 2)
    return cap, cores


def _gem_kernel(x_ref, o_ref, part_ref, *, p, eps, hw, hw_tile, last_valid):
    # x_ref:    (row_tile, hw_tile) input tile (hw_tile % 128 == 0)
    # o_ref:    (1, row_tile) lane-dense output row (written at the last hw step)
    # part_ref: (row_tile, 128) f32 running per-lane-group partial sums
    k = pl.program_id(1)

    @pl.when(k == 0)
    def _init():
        part_ref[...] = jnp.zeros_like(part_ref)

    p_int = int(round(p))
    int_p = abs(p - p_int) < 1e-12 and 1 <= p_int <= 8

    n_slices = hw_tile // 128
    for j in range(n_slices):
        x = x_ref[:, j * 128:(j + 1) * 128].astype(jnp.float32)
        x = jnp.maximum(x, jnp.float32(eps))            # clamp(min=eps)
        if int_p:
            xp = _static_int_pow(x, p_int)              # VPU fast path (p=3 -> x*x*x)
        else:
            xp = jnp.power(x, jnp.float32(p))           # general path (EUP exp/log)
        if (j + 1) * 128 > last_valid:
            # This slice can contain lanes past hw on the LAST hw step (undefined
            # boundary data, possibly NaN/Inf): zero them.  On earlier steps the
            # predicate is all-true.  Mask xp, never the ones vector (NaN*0 = NaN).
            col = lax.broadcasted_iota(jnp.int32, xp.shape, 1) + (k * hw_tile + j * 128)
            xp = jnp.where(col < hw, xp, jnp.float32(0.0))
        part_ref[...] += xp                              # exact f32 VPU accumulation

    @pl.when(k == pl.num_programs(1) - 1)
    def _finalize():
        # Lane-dense per-row sum of the 128 partials via one small MXU contraction:
        # s[0, r] = sum_c part[r, c].
        ones_row = jnp.ones((1, 128), jnp.float32)
        s = lax.dot_general(ones_row, part_ref[...],
                            dimension_numbers=(((1,), (1,)), ((), ())),
                            preferred_element_type=jnp.float32)
        m = s * jnp.float32(1.0 / hw)                    # spatial mean
        o_ref[...] = jnp.power(m, jnp.float32(1.0 / p)).astype(o_ref.dtype)


def gem_pool(x, p=3.0, eps=1e-6):
    """x: (N, C, H, W). Returns (N, C, 1, 1), matching GeM.forward."""
    N, C, H, W = x.shape
    rows = N * C
    hw = H * W
    x2 = x.reshape(rows, hw)                             # metadata-only reshape

    itemsize = jnp.dtype(x.dtype).itemsize
    row_mult = 8 * max(1, 4 // itemsize)                 # sublane packing: 8 f32 / 16 bf16

    # ---- generation-aware VMEM budgeting ----
    vmem_cap, num_tc = _tpu_profile()
    vmem_limit = min(48 * 1024 * 1024, vmem_cap // 2)    # 48 MiB on v5e/v6e, 32 MiB on v7x
    budget = (vmem_limit * 3) // 4                       # working budget for tiles/scratch
    target_tile_bytes = 4 * 1024 * 1024                  # ~4 MiB input per buffer

    # ---- spatial (lane) tiling: always a multiple of 128 lanes ----
    MAX_HW_TILE = 4096                                   # bounds the slice loop to 32 slices
    hw_tile = min(_round_up(hw, 128), MAX_HW_TILE)
    num_hw_tiles = pl.cdiv(hw, hw_tile)
    last_valid = hw - (num_hw_tiles - 1) * hw_tile       # valid lanes on the last hw step

    # ---- row (sublane) tiling ----
    # VMEM model per row per grid step: double-buffered input slice of hw_tile lanes
    # + (row, 128) f32 partial scratch + ~3 live (row, 128) f32 slice temporaries.
    row_bytes = 2 * itemsize * hw_tile + 4 * 128 * 4
    cap_rows = max(128, ((budget // row_bytes) // 128) * 128)
    if rows <= 128:
        row_tile = _round_up(rows, row_mult)             # single row tile
    else:
        tgt_rows = max(128, _round_up(target_tile_bytes // (itemsize * hw_tile), 128))
        row_tile = max(128, min(cap_rows, tgt_rows, _round_up(rows, 128)))
        if num_tc > 1 and rows >= 256:
            # Only multi-TC chips (v7x) benefit from splitting the parallel axis.
            row_tile = min(row_tile, _round_up(pl.cdiv(rows, num_tc), 128))

    num_row_tiles = pl.cdiv(rows, row_tile)
    padded_rows = num_row_tiles * row_tile

    kernel = functools.partial(
        _gem_kernel, p=float(p), eps=float(eps), hw=hw,
        hw_tile=hw_tile, last_valid=last_valid,
    )

    p_int = int(round(float(p)))
    int_p = abs(float(p) - p_int) < 1e-12 and 1 <= p_int <= 8
    cost = pl.CostEstimate(
        flops=5 * rows * hw + 2 * 128 * rows,
        transcendentals=(rows if int_p else rows + 2 * rows * hw),
        bytes_accessed=rows * hw * itemsize + padded_rows * itemsize,
    )

    # NOTE: the last row tile may read past the end of x2 (no padding copy). Those rows
    # produce garbage confined to their own output lanes and are sliced off below.
    out = pl.pallas_call(
        kernel,
        out_shape=jax.ShapeDtypeStruct((1, padded_rows), x.dtype),
        grid=(num_row_tiles, num_hw_tiles),
        in_specs=[pl.BlockSpec((row_tile, hw_tile), lambda i, k: (i, k))],
        out_specs=pl.BlockSpec((1, row_tile), lambda i, k: (0, i)),
        scratch_shapes=[pltpu.VMEM((row_tile, 128), jnp.float32)],
        compiler_params=pltpu.CompilerParams(
            dimension_semantics=("parallel", "arbitrary"),
            vmem_limit_bytes=vmem_limit),
        cost_estimate=cost,
    )(x2)

    return out[0, :rows].reshape(N, C, 1, 1)


if __name__ == "__main__":
    key = jax.random.PRNGKey(0)
    N, C, H, W = 2, 4, 16, 16
    x = jax.random.uniform(key, (N, C, H, W), dtype=jnp.float32,
                           minval=-0.5, maxval=1.5)

    # GeM.__init__(p=3, eps=1e-6); p is a plain (non-trainable) tensor constant.
    p, eps = 3.0, 1e-6

    y = jax.block_until_ready(gem_pool(x, p, eps))

    # Reference in plain JAX (same semantics as the PyTorch forward).
    ref = jnp.power(
        jnp.mean(jnp.power(jnp.maximum(x, eps), p), axis=(2, 3), keepdims=True),
        1.0 / p,
    )
    assert y.shape == (N, C, 1, 1)
    # Tolerance leaves margin for the final 128-way MXU f32 sum (multi-pass bf16 on
    # v5e/v6e); the bulk of the accumulation is exact f32 on the VPU.
    assert jnp.allclose(y, ref, rtol=1e-3, atol=1e-6), float(jnp.max(jnp.abs(y - ref)))
    print("KERNEL_OK")
</pallas_src>

<mosaic_0001>
module attributes {stable_mosaic.version = 11 : i64} {
  func.func @_gem_kernel(%arg0: i32, %arg1: i32, %arg2: memref<8x256xf32, #tpu.memory_space<vmem>>, %arg3: memref<1x8xf32, #tpu.memory_space<vmem>>, %arg4: memref<8x128xf32, #tpu.memory_space<vmem>>) attributes {dimension_semantics = [#tpu.dimension_semantics<parallel>, #tpu.dimension_semantics<arbitrary>], iteration_bounds = array<i64: 1, 1>, scalar_prefetch = 0 : i64, scratch_operands = 1 : i64, tpu.core_type = #tpu.core_type<tc>, window_params = [{transform_indices = @transform_0, window_bounds = array<i64: 8, 256>}, {transform_indices = @transform_1, window_bounds = array<i64: 1, 8>}]} {
    %c0_i32 = arith.constant 0 : i32
    %0 = arith.cmpi eq, %arg1, %c0_i32 : i32
    %1 = arith.extui %0 : i1 to i32
    %c0_i32_0 = arith.constant 0 : i32
    %2 = arith.cmpi ne, %1, %c0_i32_0 : i32
    scf.if %2 {
      %cst_14 = arith.constant 0.000000e+00 : f32
      %22 = vector.broadcast %cst_14 : f32 to vector<8x128xf32>
      %c0_15 = arith.constant 0 : index
      %c0_16 = arith.constant 0 : index
      %23 = vector.load %arg4[%c0_15, %c0_16] : memref<8x128xf32, #tpu.memory_space<vmem>>, vector<8x128xf32>
      tpu.vector_store %arg4[%c0_15, %c0_16], %22 {strides = array<i32>} : memref<8x128xf32, #tpu.memory_space<vmem>>, vector<8x128xf32>,
    } else {
    }
    %c0 = arith.constant 0 : index
    %c0_1 = arith.constant 0 : index
    %3 = vector.load %arg2[%c0, %c0_1] : memref<8x256xf32, #tpu.memory_space<vmem>>, vector<8x128xf32>
    %cst = arith.constant 9.99999997E-7 : f32
    %4 = vector.broadcast %cst : f32 to vector<8x128xf32>
    %5 = arith.maximumf %3, %4 : vector<8x128xf32>
    %6 = arith.mulf %5, %5 : vector<8x128xf32>
    %7 = arith.mulf %5, %6 : vector<8x128xf32>
    %c0_2 = arith.constant 0 : index
    %c0_3 = arith.constant 0 : index
    %8 = vector.load %arg4[%c0_2, %c0_3] : memref<8x128xf32, #tpu.memory_space<vmem>>, vector<8x128xf32>
    %9 = arith.addf %8, %7 : vector<8x128xf32>
    %c0_4 = arith.constant 0 : index
    %c0_5 = arith.constant 0 : index
    %10 = vector.load %arg4[%c0_4, %c0_5] : memref<8x128xf32, #tpu.memory_space<vmem>>, vector<8x128xf32>
    tpu.vector_store %arg4[%c0_4, %c0_5], %9 {strides = array<i32>} : memref<8x128xf32, #tpu.memory_space<vmem>>, vector<8x128xf32>,
    %c0_6 = arith.constant 0 : index
    %c128 = arith.constant 128 : index
    %11 = vector.load %arg2[%c0_6, %c128] : memref<8x256xf32, #tpu.memory_space<vmem>>, vector<8x128xf32>
    %cst_7 = arith.constant 9.99999997E-7 : f32
    %12 = vector.broadcast %cst_7 : f32 to vector<8x128xf32>
    %13 = arith.maximumf %11, %12 : vector<8x128xf32>
    %14 = arith.mulf %13, %13 : vector<8x128xf32>
    %15 = arith.mulf %13, %14 : vector<8x128xf32>
    %c0_8 = arith.constant 0 : index
    %c0_9 = arith.constant 0 : index
    %16 = vector.load %arg4[%c0_8, %c0_9] : memref<8x128xf32, #tpu.memory_space<vmem>>, vector<8x128xf32>
    %17 = arith.addf %16, %15 : vector<8x128xf32>
    %c0_10 = arith.constant 0 : index
    %c0_11 = arith.constant 0 : index
    %18 = vector.load %arg4[%c0_10, %c0_11] : memref<8x128xf32, #tpu.memory_space<vmem>>, vector<8x128xf32>
    tpu.vector_store %arg4[%c0_10, %c0_11], %17 {strides = array<i32>} : memref<8x128xf32, #tpu.memory_space<vmem>>, vector<8x128xf32>,
    %c0_i32_12 = arith.constant 0 : i32
    %19 = arith.cmpi eq, %arg1, %c0_i32_12 : i32
    %20 = arith.extui %19 : i1 to i32
    %c0_i32_13 = arith.constant 0 : i32
    %21 = arith.cmpi ne, %20, %c0_i32_13 : i32
    scf.if %21 {
      %cst_14 = arith.constant 1.000000e+00 : f32
      %22 = vector.broadcast %cst_14 : f32 to vector<1x128xf32>
      %c0_15 = arith.constant 0 : index
      %c0_16 = arith.constant 0 : index
      %23 = vector.load %arg4[%c0_15, %c0_16] : memref<8x128xf32, #tpu.memory_space<vmem>>, vector<8x128xf32>
      %cst_17 = arith.constant dense<0.000000e+00> : vector<1x8xf32>
      %24 = tpu.matmul %22, %23, %cst_17 {dimension_numbers = #tpu.dot_dimension_numbers<[1], [1], [0], [0], [0, 0, 1, 0], [], []>} : vector<1x128xf32>, vector<8x128xf32>, vector<1x8xf32> -> vector<1x8xf32>
      %cst_18 = arith.constant 3.906250e-03 : f32
      %25 = vector.broadcast %cst_18 : f32 to vector<1x8xf32>
      %26 = arith.mulf %24, %25 : vector<1x8xf32>
      %cst_19 = arith.constant 0.333333343 : f32
      %27 = vector.broadcast %cst_19 : f32 to vector<1x8xf32>
      %28 = math.powf %26, %27 : vector<1x8xf32>
      %c0_20 = arith.constant 0 : index
      %c0_21 = arith.constant 0 : index
      %29 = vector.load %arg3[%c0_20, %c0_21] : memref<1x8xf32, #tpu.memory_space<vmem>>, vector<1x8xf32>
      tpu.vector_store %arg3[%c0_20, %c0_21], %28 {strides = array<i32>} : memref<1x8xf32, #tpu.memory_space<vmem>>, vector<1x8xf32>,
    } else {
    }
    return
  }
  func.func @transform_0(%arg0: i32, %arg1: i32) -> (i32, i32) {
    %c0_i32 = arith.constant 0 : i32
    return %arg0, %arg1 : i32, i32
  }
  func.func @transform_1(%arg0: i32, %arg1: i32) -> (i32, i32) {
    %c0_i32 = arith.constant 0 : i32
    %c0_i32_0 = arith.constant 0 : i32
    return %c0_i32, %arg0 : i32, i32
  }
}

</mosaic_0001>

<llo_original>
// kernel: tpu_custom_call.1
$region0: #{tpu_custom_call.1}
  #allocation0 [shape = 'u32[]', space=smem, size = 0x4, offset = 0x4, fixed_abs, tag = 'smem constant byte address 0x4 - core index']
  #allocation1 [shape = 'u32[72,128]{1,0:T(1,128)}', space=vmem, size = 0x9000, scoped, tag = 'internal scratch']
  #allocation2 [shape = 'f32[8,128]{1,0:T(8,128)}', space=vmem, size = 0x1000, scoped, tag = 'scratch operand']
  %s0 = inlined_call_operand.hbm [shape: f32[8,256], index: 0, kind: input, shape index: {}]
  %s1 = inlined_call_operand.hbm [shape: f32[1,8], index: 1, kind: output, shape index: {}]
  %s2 = sld [smem:[#allocation0]]
  $region26: #{tpu_custom_call.1} parent=0
    _
  %s4 = ssub.s32 1, %s2
  %s5 = scalar_select 0, %s4, %s2
  $region1: #{tpu_custom_call.1} parent=0
    #allocation3 [shape = 'u8[8192]{0}', space=vmem, size = 0x2000, scoped, tag = 'input window, operand 0, single buffered']
    #allocation4 [shape = 's32[1]{0}', space=sflag, size = 0x4, scoped, tag = 'scoped memory for tpu_custom_call.1']
    #allocation5 [shape = 's32[1]{0}', space=sflag, size = 0x4, scoped, tag = 'scoped memory for tpu_custom_call.1']
    #allocation6 [shape = 'u8[512]{0}', space=vmem, size = 0x400, scoped, tag = 'output window, operand 0, single buffered']
    %6 = vsyncpa [#allocation4], 0
    %7 = vsyncpa [#allocation5], 0
    // Predicated region
    $region2: #{tpu_custom_call.1} parent=1 // pred_check
      _
    $region3: #{tpu_custom_call.1} parent=1 // pred_check_branch
      %9 = sbr.rel (0) target = $region5
    $region4: #{tpu_custom_call.1} parent=1 // pred_region
      %11 = vsyncadd [#allocation4], 0
      %s13 = sshll.u32 %s0, 4
      %s14 = int_to_ptr.hbm [resolvable:$true] %s13
      %s15 = sshll.u32 [#allocation3], 4
      %s16 = int_to_ptr.vmem [resolvable:$true] %s15
      %18 = dma.hbm_to_vmem [thread:$0]  %s14, 256, %s16, [#allocation4]
    $region5: #{tpu_custom_call.1} parent=1 // pred_fallthru
      _
    // Predicated region
    $region6: #{tpu_custom_call.1} parent=1 // pred_check
      _
    $region7: #{tpu_custom_call.1} parent=1 // pred_check_branch
      %20 = sbr.rel (0) target = $region9
    $region8: #{tpu_custom_call.1} parent=1 // pred_region
      %22 = dma.done [#allocation4], 256
    $region9: #{tpu_custom_call.1} parent=1 // pred_fallthru
      _
    %p23 = scmp.eq.s32.totalorder 0, 0
    // Predicated region
    $region10: #{tpu_custom_call.1} parent=1 // pred_check
      %p24 = pneg %p23
    $region11: #{tpu_custom_call.1} parent=1 // pred_check_branch
      %26 = sbr.rel (%p24) target = $region13
    $region12: #{tpu_custom_call.1} parent=1 // pred_region
      %27 = vst [vmem:[#allocation2] sm:$0xff] 0.0
    $region13: #{tpu_custom_call.1} parent=1 // pred_fallthru
      _
    %v28 = vld [vmem:[#allocation3] sm:$0xff]
    %v29 = vmax.f32 %v28, 1e-06
    %v30 = vmul.f32 %v29, %v29
    %v31 = vmul.f32 %v29, %v30
    %v32 = vld [vmem:[#allocation2] sm:$0xff]
    %v33 = vadd.f32 %v32, %v31
    %34 = vst [vmem:[#allocation2] sm:$0xff] %v33
    %v35 = vld [vmem:[#allocation3 + $0x8] sm:$0xff]
    %v36 = vmax.f32 %v35, 1e-06
    %v37 = vmul.f32 %v36, %v36
    %v38 = vmul.f32 %v36, %v37
    %v39 = vld [vmem:[#allocation2] sm:$0xff]
    %v40 = vadd.f32 %v39, %v38
    %41 = vst [vmem:[#allocation2] sm:$0xff] %v40
    // Predicated region
    $region14: #{tpu_custom_call.1} parent=1 // pred_check
      %p42 = pneg %p23
    $region15: #{tpu_custom_call.1} parent=1 // pred_check_branch
      %44 = sbr.rel (%p42) target = $region17
    $region16: #{tpu_custom_call.1} parent=1 // pred_region
      %v45 = vld [vmem:[#allocation2] sm:$0xff]
      %46 = vmatpush.xpose.msra.mxu0 0.0
      %47 = vmatpush.xpose.msra.mxu0 0.0
      %48 = vmatpush.xpose.msra.mxu0 0.0
      %49 = vmatpush.xpose.msra.mxu0 0.0
      %50 = vmatpush.xpose.msra.mxu0 0.0
      %51 = vmatpush.xpose.msra.mxu0 0.0
      %52 = vmatpush.xpose.msra.mxu0 0.0
      %53 = vmatpush.xpose.msra.mxu0 0.0
      %54 = vmatpush.xpose.msra.mxu0 0.0
      %55 = vmatpush.xpose.msra.mxu0 0.0
      %56 = vmatpush.xpose.msra.mxu0 0.0
      %57 = vmatpush.xpose.msra.mxu0 0.0
      %58 = vmatpush.xpose.msra.mxu0 0.0
      %59 = vmatpush.xpose.msra.mxu0 0.0
      %60 = vmatpush.xpose.msra.mxu0 0.0
      %61 = vmatpush.xpose.msra.mxu0 %v45
      %62 = vmatmul.f32.gmra.mxu0 1.0
      %v63 = vpop.f32.mrf.mxu0
      %v64 = vadd.f32 0.0, %v63
      %65 = vdwg.mxu0
      %v66 = vmul.f32 %v64, 0.00390625
      %v67 = vpow.f32 %v66, 0.33333334
      %vm68 = vcmask 57344
      %69 = vst.msk [vmem:[#allocation6] sm:$0x1] %vm68, %v67
    $region17: #{tpu_custom_call.1} parent=1 // pred_fallthru
      _
    // Predicated region
    $region18: #{tpu_custom_call.1} parent=1 // pred_check
      _
    $region19: #{tpu_custom_call.1} parent=1 // pred_check_branch
      %71 = sbr.rel (0) target = $region21
    $region20: #{tpu_custom_call.1} parent=1 // pred_region
      %73 = vsyncadd [#allocation5], 0
      %s75 = sshll.u32 [#allocation6], 4
      %s76 = int_to_ptr.vmem [resolvable:$true] %s75
      %s77 = sshll.u32 %s1, 4
      %s78 = int_to_ptr.hbm [resolvable:$true] %s77
      %80 = dma.vmem_to_hbm [thread:$0]  %s76, 16, %s78, [#allocation5]
    $region21: #{tpu_custom_call.1} parent=1 // pred_fallthru
      _
    // Predicated region
    $region22: #{tpu_custom_call.1} parent=1 // pred_check
      _
    $region23: #{tpu_custom_call.1} parent=1 // pred_check_branch
      %82 = sbr.rel (0) target = $region25
    $region24: #{tpu_custom_call.1} parent=1 // pred_region
      %84 = dma.done [#allocation5], 16
    $region25: #{tpu_custom_call.1} parent=1 // pred_fallthru
      _
    %85 = vsyncpa [#allocation4], 1
    %86 = vsyncpa [#allocation5], 1

</llo_original>
